<compile_context>
chip_gen: v6e
topology: v6e:2x2x1
jax: 0.10.0
libtpu: 0.0.40
codegen_flags: <defaults>
</compile_context>

<pallas_src>
import functools

import jax
import jax.numpy as jnp
from jax.experimental import pallas as pl
from jax.experimental.pallas import tpu as pltpu

LANE = 128
SUBLANE = 8


def _round_up(x, m):
    return ((x + m - 1) // m) * m


def _bce_elems_f32(o, t):
    """Elementwise BCE with PyTorch's clamp-at--100 on the log terms."""
    o = o.astype(jnp.float32)
    t = t.astype(jnp.float32)
    log_o = jnp.maximum(jnp.log(o), jnp.float32(-100.0))
    log_1mo = jnp.maximum(jnp.log(1.0 - o), jnp.float32(-100.0))
    return -(t * log_o + (1.0 - t) * log_1mo)


def _bce_kernel(o_ref, t_ref, part_ref, *, steps_per_split, grid_rows,
                tile_rows, valid_rows_last, has_dup, rows_ragged, hard_labels):
    s = pl.program_id(0)   # "parallel" split axis (megacore shard on v7x)
    i = pl.program_id(1)   # "arbitrary" streaming axis

    # The (8, 128) output block doubles as the per-split accumulator: it stays
    # resident in VMEM across the inner axis, so per-step accumulator traffic
    # is a single vreg instead of a full-tile read-modify-write.
    @pl.when(i == 0)
    def _():
        part_ref[...] = jnp.zeros_like(part_ref)

    # Cast inside the kernel: HBM traffic stays in the native dtype.
    o = o_ref[...].astype(jnp.float32)
    t = t_ref[...].astype(jnp.float32)

    if hard_labels:
        # One EUP log per element — exact for 0/1 adversarial targets.
        p = jnp.where(t > 0.5, o, 1.0 - o)
        elem = -jnp.maximum(jnp.log(p), jnp.float32(-100.0))
    else:
        log_o = jnp.maximum(jnp.log(o), jnp.float32(-100.0))
        log_1mo = jnp.maximum(jnp.log(1.0 - o), jnp.float32(-100.0))
        elem = -(t * log_o + (1.0 - t) * log_1mo)

    def fold_and_add(x):
        # Leading-axis fold to one (8, 128) vreg: pure VPU vreg adds, no XLU.
        part_ref[...] += x.reshape(tile_rows // SUBLANE, SUBLANE, LANE).sum(axis=0)

    blk = s * steps_per_split + i   # global block index (int32; rows < 2^24)

    if rows_ragged:
        # Only the last *real* block can be partial; every other step takes the
        # mask-free path (no per-step iota/compare/select).
        @pl.when(blk < grid_rows - 1)
        def _():
            fold_and_add(elem)

        @pl.when(blk == grid_rows - 1)
        def _():
            row_ids = jax.lax.broadcasted_iota(jnp.int32, (tile_rows, LANE), 0)
            fold_and_add(jnp.where(row_ids < valid_rows_last, elem,
                                   jnp.float32(0.0)))
    elif has_dup:
        # Clamped overhang steps of an uneven split contribute nothing.
        @pl.when(blk < grid_rows)
        def _():
            fold_and_add(elem)
    else:
        fold_and_add(elem)


def adversarial_loss(outputs, labels, *, tile_rows=8192, num_splits=2,
                     hard_labels=False):
    """BCE(outputs, labels), mean reduction — equivalent to nn.BCELoss()."""
    assert outputs.shape == labels.shape
    total = int(outputs.size)

    # Row-major flatten in native dtype (layout-only, no copy).
    # Note for callers (v5e/v6e roofline): bf16 labels/outputs halve HBM bytes;
    # the kernel casts to f32 in VMEM, so no kernel change is needed.
    out_flat = jnp.ravel(outputs)
    lab_flat = jnp.ravel(labels)

    # Lane-exact main body + tiny plain-JAX tail (< 128 elements) instead of a
    # full-array jnp.pad (which would read+write both inputs once in HBM before
    # the kernel even runs).
    main = (total // LANE) * LANE
    tail_sum = jnp.float32(0.0)
    if main != total:
        tail_sum = jnp.sum(_bce_elems_f32(out_flat[main:], lab_flat[main:]))
    if main == 0:
        return tail_sum / jnp.float32(total)

    rows = main // LANE
    if main == total:
        out2d = out_flat.reshape(rows, LANE)
        lab2d = lab_flat.reshape(rows, LANE)
    else:
        # TODO(synk): for very large non-multiple-of-128 inputs this prefix
        # slice still materializes a copy; a manual-DMA (memory_space=pl.ANY)
        # path would make it zero-copy.
        out2d = out_flat[:main].reshape(rows, LANE)
        lab2d = lab_flat[:main].reshape(rows, LANE)

    # ~4 MiB f32 / 2 MiB bf16 per input tile by default so the ~0.35 us
    # grid-step overhead stays small even at v7x's 3.2 TB/s; shrink for small
    # inputs. Always a multiple of 8 so the BlockSpec satisfies (8, 128).
    tile_rows = max(SUBLANE, min(int(tile_rows), _round_up(rows, SUBLANE)))
    tile_rows = _round_up(tile_rows, SUBLANE)
    grid_rows = -(-rows // tile_rows)                 # ceil div
    num_splits = max(1, min(int(num_splits), grid_rows))
    steps_per_split = -(-grid_rows // num_splits)     # ceil div
    has_dup = num_splits * steps_per_split != grid_rows
    rows_ragged = grid_rows * tile_rows != rows
    valid_rows_last = rows - (grid_rows - 1) * tile_rows

    if has_dup:
        def in_map(s, i):
            # Clamp overhang steps of the last split onto the last real block
            # (skipped inside the kernel) so the block index never leaves the
            # array.
            return (jnp.minimum(s * steps_per_split + i, grid_rows - 1), 0)
    else:
        def in_map(s, i):
            return (s * steps_per_split + i, 0)

    itemsize = outputs.dtype.itemsize
    cost = pl.CostEstimate(
        flops=5 * total,
        transcendentals=(1 if hard_labels else 2) * total,
        bytes_accessed=2 * main * itemsize + num_splits * SUBLANE * LANE * 4,
    )

    kernel = functools.partial(
        _bce_kernel,
        steps_per_split=steps_per_split,
        grid_rows=grid_rows,
        tile_rows=tile_rows,
        valid_rows_last=valid_rows_last,
        has_dup=has_dup,
        rows_ragged=rows_ragged,
        hard_labels=hard_labels,
    )

    partials = pl.pallas_call(
        kernel,
        out_shape=jax.ShapeDtypeStruct((num_splits * SUBLANE, LANE), jnp.float32),
        grid_spec=pltpu.PrefetchScalarGridSpec(
            num_scalar_prefetch=0,
            grid=(num_splits, steps_per_split),
            in_specs=[
                pl.BlockSpec((tile_rows, LANE), in_map),
                pl.BlockSpec((tile_rows, LANE), in_map),
            ],
            out_specs=pl.BlockSpec((SUBLANE, LANE), lambda s, i: (s, 0)),
        ),
        compiler_params=pltpu.CompilerParams(
            # Leading axis shards across TensorCores on v7x (megacore); it is a
            # plain sequential loop (near-zero cost) on 1-TC v5e/v6e.
            dimension_semantics=("parallel", "arbitrary"),
            # 2 inputs x 2 pipeline buffers x <=4 MiB + 4-8 KiB partials ~16 MiB.
            vmem_limit_bytes=32 * 1024 * 1024,
        ),
        cost_estimate=cost,
    )(out2d, lab2d)

    # Tiny lane-dense partial-sum slab: finish the reduction in plain JAX.
    return (jnp.sum(partials) + tail_sum) / jnp.float32(total)


def _reference_bce(outputs, labels):
    return jnp.mean(_bce_elems_f32(outputs, labels))


def _check(shape, key, **kw):
    k1, k2 = jax.random.split(key)
    outputs = jax.nn.sigmoid(jax.random.normal(k1, shape, jnp.float32))
    labels = (jax.random.uniform(k2, shape) > 0.5).astype(jnp.float32)
    loss = adversarial_loss(outputs, labels, **kw)
    jax.block_until_ready(loss)
    ref = _reference_bce(outputs, labels)
    assert jnp.allclose(loss, ref, rtol=1e-5, atol=1e-5), (shape, kw, loss, ref)


if __name__ == "__main__":
    root = jax.random.PRNGKey(0)
    keys = jax.random.split(root, 6)

    # Primary case: discriminator-style outputs in (0,1), binary labels, NCHW.
    _check((2, 4, 16, 16), keys[0])

    # Coverage of the remaining code paths at small sizes:
    _check((1, 1, 30, 30), keys[1])                              # <128 plain-JAX tail + partial last block
    _check((2, 3, 17, 13), keys[2], tile_rows=16)                # tail + ragged rows
    _check((2, 8, 32, 32), keys[3], tile_rows=64, num_splits=2)  # even 2-way split
    _check((2, 8, 40, 32), keys[4], tile_rows=56, num_splits=2)  # uneven split (clamped dup) + ragged
    _check((2, 4, 16, 16), keys[5], hard_labels=True)            # single-log hard-label fast path

    print("KERNEL_OK")
</pallas_src>

<mosaic_0001>
module attributes {stable_mosaic.version = 11 : i64} {
  func.func @_bce_kernel(%arg0: i32, %arg1: i32, %arg2: memref<16x128xf32, #tpu.memory_space<vmem>>, %arg3: memref<16x128xf32, #tpu.memory_space<vmem>>, %arg4: memref<8x128xf32, #tpu.memory_space<vmem>>) attributes {dimension_semantics = [#tpu.dimension_semantics<parallel>, #tpu.dimension_semantics<arbitrary>], iteration_bounds = array<i64: 1, 1>, scalar_prefetch = 0 : i64, scratch_operands = 0 : i64, tpu.core_type = #tpu.core_type<tc>, window_params = [{transform_indices = @transform_0, window_bounds = array<i64: 16, 128>}, {transform_indices = @transform_1, window_bounds = array<i64: 16, 128>}, {transform_indices = @transform_2, window_bounds = array<i64: 8, 128>}]} {
    %c0_i32 = arith.constant 0 : i32
    %0 = arith.cmpi eq, %arg1, %c0_i32 : i32
    %1 = arith.extui %0 : i1 to i32
    %c0_i32_0 = arith.constant 0 : i32
    %2 = arith.cmpi ne, %1, %c0_i32_0 : i32
    scf.if %2 {
      %cst_13 = arith.constant 0.000000e+00 : f32
      %25 = vector.broadcast %cst_13 : f32 to vector<8x128xf32>
      %c0_14 = arith.constant 0 : index
      %c0_15 = arith.constant 0 : index
      %26 = vector.load %arg4[%c0_14, %c0_15] : memref<8x128xf32, #tpu.memory_space<vmem>>, vector<8x128xf32>
      tpu.vector_store %arg4[%c0_14, %c0_15], %25 {strides = array<i32>} : memref<8x128xf32, #tpu.memory_space<vmem>>, vector<8x128xf32>,
    } else {
    }
    %c0 = arith.constant 0 : index
    %c0_1 = arith.constant 0 : index
    %3 = vector.load %arg2[%c0, %c0_1] : memref<16x128xf32, #tpu.memory_space<vmem>>, vector<16x128xf32>
    %c0_2 = arith.constant 0 : index
    %c0_3 = arith.constant 0 : index
    %4 = vector.load %arg3[%c0_2, %c0_3] : memref<16x128xf32, #tpu.memory_space<vmem>>, vector<16x128xf32>
    %5 = math.log %3 : vector<16x128xf32>
    %cst = arith.constant -1.000000e+02 : f32
    %6 = vector.broadcast %cst : f32 to vector<16x128xf32>
    %7 = arith.maximumf %5, %6 : vector<16x128xf32>
    %cst_4 = arith.constant 1.000000e+00 : f32
    %8 = vector.broadcast %cst_4 : f32 to vector<16x128xf32>
    %9 = arith.subf %8, %3 : vector<16x128xf32>
    %10 = math.log %9 : vector<16x128xf32>
    %cst_5 = arith.constant -1.000000e+02 : f32
    %11 = vector.broadcast %cst_5 : f32 to vector<16x128xf32>
    %12 = arith.maximumf %10, %11 : vector<16x128xf32>
    %13 = arith.mulf %4, %7 : vector<16x128xf32>
    %cst_6 = arith.constant 1.000000e+00 : f32
    %14 = vector.broadcast %cst_6 : f32 to vector<16x128xf32>
    %15 = arith.subf %14, %4 : vector<16x128xf32>
    %16 = arith.mulf %15, %12 : vector<16x128xf32>
    %17 = arith.addf %13, %16 : vector<16x128xf32>
    %cst_7 = arith.constant 0.000000e+00 : f32
    %18 = vector.broadcast %cst_7 : f32 to vector<16x128xf32>
    %19 = arith.subf %18, %17 : vector<16x128xf32>
    %c0_8 = arith.constant 0 : index
    %c0_9 = arith.constant 0 : index
    %20 = vector.load %arg4[%c0_8, %c0_9] : memref<8x128xf32, #tpu.memory_space<vmem>>, vector<8x128xf32>
    %21 = vector.shape_cast %19 : vector<16x128xf32> to vector<2x8x128xf32>
    %cst_10 = arith.constant dense<0.000000e+00> : vector<8x128xf32>
    %22 = vector.multi_reduction <add>, %21, %cst_10 [0] : vector<2x8x128xf32> to vector<8x128xf32>
    %23 = arith.addf %20, %22 : vector<8x128xf32>
    %c0_11 = arith.constant 0 : index
    %c0_12 = arith.constant 0 : index
    %24 = vector.load %arg4[%c0_11, %c0_12] : memref<8x128xf32, #tpu.memory_space<vmem>>, vector<8x128xf32>
    tpu.vector_store %arg4[%c0_11, %c0_12], %23 {strides = array<i32>} : memref<8x128xf32, #tpu.memory_space<vmem>>, vector<8x128xf32>,
    return
  }
  func.func @transform_0(%arg0: i32, %arg1: i32) -> (i32, i32) {
    %c1_i32 = arith.constant 1 : i32
    %0 = arith.muli %arg0, %c1_i32 : i32
    %1 = arith.addi %0, %arg1 : i32
    %c0_i32 = arith.constant 0 : i32
    %c0_i32_0 = arith.constant 0 : i32
    return %1, %c0_i32 : i32, i32
  }
  func.func @transform_1(%arg0: i32, %arg1: i32) -> (i32, i32) {
    %c1_i32 = arith.constant 1 : i32
    %0 = arith.muli %arg0, %c1_i32 : i32
    %1 = arith.addi %0, %arg1 : i32
    %c0_i32 = arith.constant 0 : i32
    %c0_i32_0 = arith.constant 0 : i32
    return %1, %c0_i32 : i32, i32
  }
  func.func @transform_2(%arg0: i32, %arg1: i32) -> (i32, i32) {
    %c0_i32 = arith.constant 0 : i32
    %c0_i32_0 = arith.constant 0 : i32
    return %arg0, %c0_i32 : i32, i32
  }
}

</mosaic_0001>

<llo_original>
// kernel: tpu_custom_call.1
$region0: #{tpu_custom_call.1}
  #allocation0 [shape = 'u32[]', space=smem, size = 0x4, offset = 0x4, fixed_abs, tag = 'smem constant byte address 0x4 - core index']
  #allocation1 [shape = 'u32[144,128]{1,0:T(1,128)}', space=vmem, size = 0x12000, scoped, tag = 'internal scratch']
  %s0 = inlined_call_operand.hbm [shape: f32[16,128], index: 0, kind: input, shape index: {}]
  %s1 = inlined_call_operand.hbm [shape: f32[16,128], index: 1, kind: input, shape index: {}]
  %s2 = inlined_call_operand.hbm [shape: f32[8,128], index: 2, kind: output, shape index: {}]
  %s3 = sld [smem:[#allocation0]]
  $region30: #{tpu_custom_call.1} parent=0
    _
  %s5 = ssub.s32 1, %s3
  %s6 = scalar_select 0, %s5, %s3
  $region1: #{tpu_custom_call.1} parent=0
    #allocation2 [shape = 'u8[8192]{0}', space=vmem, size = 0x2000, scoped, tag = 'input window, operand 0, single buffered']
    #allocation3 [shape = 's32[1]{0}', space=sflag, size = 0x4, scoped, tag = 'scoped memory for tpu_custom_call.1']
    #allocation4 [shape = 's32[1]{0}', space=sflag, size = 0x4, scoped, tag = 'scoped memory for tpu_custom_call.1']
    #allocation5 [shape = 'u8[8192]{0}', space=vmem, size = 0x2000, scoped, tag = 'input window, operand 1, single buffered']
    #allocation6 [shape = 's32[1]{0}', space=sflag, size = 0x4, scoped, tag = 'scoped memory for tpu_custom_call.1']
    #allocation7 [shape = 'u8[4096]{0}', space=vmem, size = 0x1000, scoped, tag = 'output window, operand 0, single buffered']
    %7 = vsyncpa [#allocation3], 0
    %8 = vsyncpa [#allocation6], 0
    %9 = vsyncpa [#allocation4], 0
    // Predicated region
    $region2: #{tpu_custom_call.1} parent=1 // pred_check
      _
    $region3: #{tpu_custom_call.1} parent=1 // pred_check_branch
      %11 = sbr.rel (0) target = $region5
    $region4: #{tpu_custom_call.1} parent=1 // pred_region
      %s12 = sadd.s32 0, 0
      %s13 = smul.u32 2, %s12
      %s15 = ssub.s32 256, 256
      %16 = vsyncadd [#allocation3], %s15
      %s17 = smul.addr %s13, 128
      %s18 = scalar_lea.hbm %s0, %s17
      %s19 = sshll.u32 [#allocation2], 4
      %s20 = int_to_ptr.vmem [resolvable:$true] %s19
      %25 = dma.hbm_to_vmem [thread:$0]  %s18, 256, %s20, [#allocation3], 128, 128, 8
    $region5: #{tpu_custom_call.1} parent=1 // pred_fallthru
      _
    // Predicated region
    $region6: #{tpu_custom_call.1} parent=1 // pred_check
      _
    $region7: #{tpu_custom_call.1} parent=1 // pred_check_branch
      %27 = sbr.rel (0) target = $region9
    $region8: #{tpu_custom_call.1} parent=1 // pred_region
      %s28 = sadd.s32 0, 0
      %s29 = smul.u32 2, %s28
      %s31 = ssub.s32 256, 256
      %32 = vsyncadd [#allocation6], %s31
      %s33 = smul.addr %s29, 128
      %s34 = scalar_lea.hbm %s1, %s33
      %s35 = sshll.u32 [#allocation5], 4
      %s36 = int_to_ptr.vmem [resolvable:$true] %s35
      %41 = dma.hbm_to_vmem [thread:$0]  %s34, 256, %s36, [#allocation6], 128, 128, 8
    $region9: #{tpu_custom_call.1} parent=1 // pred_fallthru
      _
    // Predicated region
    $region10: #{tpu_custom_call.1} parent=1 // pred_check
      _
    $region11: #{tpu_custom_call.1} parent=1 // pred_check_branch
      %43 = sbr.rel (0) target = $region13
    $region12: #{tpu_custom_call.1} parent=1 // pred_region
      %44 = dma.done [#allocation3], 256
    $region13: #{tpu_custom_call.1} parent=1 // pred_fallthru
      _
    // Predicated region
    $region14: #{tpu_custom_call.1} parent=1 // pred_check
      _
    $region15: #{tpu_custom_call.1} parent=1 // pred_check_branch
      %46 = sbr.rel (0) target = $region17
    $region16: #{tpu_custom_call.1} parent=1 // pred_region
      %47 = dma.done [#allocation6], 256
    $region17: #{tpu_custom_call.1} parent=1 // pred_fallthru
      _
    %s48 = sadd.s32 0, 0
    %s49 = smul.u32 2, %s48
    %s50 = sadd.s32 0, 0
    %s51 = smul.u32 2, %s50
    %p52 = scmp.eq.s32.totalorder 0, 0
    // Predicated region
    $region18: #{tpu_custom_call.1} parent=1 // pred_check
      %p53 = pneg %p52
    $region19: #{tpu_custom_call.1} parent=1 // pred_check_branch
      %55 = sbr.rel (%p53) target = $region21
    $region20: #{tpu_custom_call.1} parent=1 // pred_region
      %56 = vst [vmem:[#allocation7] sm:$0xff] 0.0
    $region21: #{tpu_custom_call.1} parent=1 // pred_fallthru
      _
    %v57 = vld [vmem:[#allocation2] sm:$0xff]
    %v58 = vld [vmem:[#allocation2 + $0x8] sm:$0xff]
    %v59 = vld [vmem:[#allocation5] sm:$0xff]
    %v60 = vld [vmem:[#allocation5 + $0x8] sm:$0xff]
    %v61 = vlog2.pop %v57
    %v62 = vmul.f32 %v61, 0.6931472
    %v63 = vlog2.pop %v58
    %v64 = vmul.f32 %v63, 0.6931472
    %v65 = vmax.f32 %v62, -100.0
    %v66 = vmax.f32 %v64, -100.0
    %v67 = vsub.f32 1.0, %v57
    %v68 = vsub.f32 1.0, %v58
    %v69 = vlog2.pop %v67
    %v70 = vmul.f32 %v69, 0.6931472
    %v71 = vlog2.pop %v68
    %v72 = vmul.f32 %v71, 0.6931472
    %v73 = vmax.f32 %v70, -100.0
    %v74 = vmax.f32 %v72, -100.0
    %v75 = vmul.f32 %v59, %v65
    %v76 = vmul.f32 %v60, %v66
    %v77 = vsub.f32 1.0, %v59
    %v78 = vsub.f32 1.0, %v60
    %v79 = vmul.f32 %v77, %v73
    %v80 = vmul.f32 %v78, %v74
    %v81 = vadd.f32 %v75, %v79
    %v82 = vadd.f32 %v76, %v80
    %v83 = vsub.f32 0.0, %v81
    %v84 = vsub.f32 0.0, %v82
    %v85 = vld [vmem:[#allocation7] sm:$0xff]
    %v86 = vadd.f32 %v83, %v84
    %v87 = vadd.f32 %v85, %v86
    %88 = vst [vmem:[#allocation7] sm:$0xff] %v87
    // Predicated region
    $region22: #{tpu_custom_call.1} parent=1 // pred_check
      _
    $region23: #{tpu_custom_call.1} parent=1 // pred_check_branch
      %90 = sbr.rel (0) target = $region25
    $region24: #{tpu_custom_call.1} parent=1 // pred_region
      %s92 = ssub.s32 128, 128
      %93 = vsyncadd [#allocation4], %s92
      %s95 = sshll.u32 [#allocation7], 4
      %s96 = int_to_ptr.vmem [resolvable:$true] %s95
      %98 = dma.vmem_to_hbm [thread:$0]  %s96, 128, %s2, [#allocation4]
    $region25: #{tpu_custom_call.1} parent=1 // pred_fallthru
      _
    // Predicated region
    $region26: #{tpu_custom_call.1} parent=1 // pred_check
      _
    $region27: #{tpu_custom_call.1} parent=1 // pred_check_branch
      %100 = sbr.rel (0) target = $region29
    $region28: #{tpu_custom_call.1} parent=1 // pred_region
      %101 = dma.done [#allocation4], 128
    $region29: #{tpu_custom_call.1} parent=1 // pred_fallthru
      _
    %102 = vsyncpa [#allocation3], 1
    %103 = vsyncpa [#allocation6], 1
    %104 = vsyncpa [#allocation4], 1

</llo_original>
